<compile_context>
chip_gen: v6e
topology: v6e:2x2x1
jax: 0.10.0
libtpu: 0.0.40
codegen_flags: <defaults>
</compile_context>

<pallas_src>
import functools

import jax
import jax.numpy as jnp
from jax import lax
from jax.experimental import pallas as pl
from jax.experimental.pallas import tpu as pltpu

HIDDEN = 256
LN_EPS = 1e-5


def _round_up(x, m):
    return ((x + m - 1) // m) * m


def _cdiv(a, b):
    return -(-a // b)


def _layernorm(h, gamma, beta):
    mean = jnp.mean(h, axis=-1, keepdims=True)
    var = jnp.mean(jnp.square(h - mean), axis=-1, keepdims=True)
    inv = lax.rsqrt(var + LN_EPS)
    return (h - mean) * inv * gamma + beta


def _gelu_exact(h):
    # PyTorch nn.GELU() default: 0.5 * x * (1 + erf(x / sqrt(2)))
    return 0.5 * h * (1.0 + lax.erf(h * (1.0 / jnp.sqrt(2.0).astype(h.dtype))))


def reward_kernel(obs_ref, act_ref,
                  w1o_ref, w1a_ref, p1_ref,
                  w2_ref, p2_ref,
                  w3_ref, b3_ref,
                  o_ref):
    obs = obs_ref[...].astype(jnp.float32)
    act = act_ref[...].astype(jnp.float32)

    # fc1: split-input Linear (avoids materializing the concat) -> LN -> GELU
    h = (jnp.dot(obs, w1o_ref[...], preferred_element_type=jnp.float32)
         + jnp.dot(act, w1a_ref[...], preferred_element_type=jnp.float32)
         + p1_ref[0:1, :])
    h = _gelu_exact(_layernorm(h, p1_ref[1:2, :], p1_ref[2:3, :]))

    # fc2: Linear -> LayerNorm -> GELU
    h = jnp.dot(h, w2_ref[...], preferred_element_type=jnp.float32) + p2_ref[0:1, :]
    h = _gelu_exact(_layernorm(h, p2_ref[1:2, :], p2_ref[2:3, :]))

    # r_fc: 256 -> 1 as VPU multiply + cross-lane reduce (no N=1 MXU matmul)
    r = jnp.sum(h * w3_ref[...], axis=-1, keepdims=True) + b3_ref[...]
    o_ref[...] = r.astype(o_ref.dtype)


def continuous_mlp_reward(observation, action, params, *, batch_tile=256):
    """Fused MLP reward head.  Returns shape (batch,)."""
    B, obs_dim = observation.shape
    act_dim = action.shape[1]

    (w1, b1, g1, be1, w2, b2, g2, be2, w3, b3) = params

    # --- parameter re-packing (tiny, one-time, fused by XLA under jit) ------
    w1_obs = w1[:obs_dim]                       # (obs_dim, H)
    w1_act = w1[obs_dim:]                       # (act_dim, H)
    p1 = jnp.stack([b1, g1, be1])               # (3, H): bias, gamma, beta
    p2 = jnp.stack([b2, g2, be2])               # (3, H)
    w3_row = w3.reshape(1, HIDDEN)              # (1, H)
    b3_2d = b3.reshape(1, 1)                    # (1, 1)

    # --- batch tiling -------------------------------------------------------
    # Tile as large as requested, but cap it so (when B is big enough) the grid
    # has >= 2 parallel steps for v7x's two TensorCores.  Always a multiple of 8.
    batch_tile = max(8, _round_up(batch_tile, 8))
    tile = min(batch_tile, max(8, _round_up(_cdiv(B, 2), 8)))
    num_tiles = _cdiv(B, tile)
    Bp = num_tiles * tile

    if Bp != B:  # pad ragged batches; padded rows are discarded below
        pad = Bp - B
        observation = jnp.pad(observation, ((0, pad), (0, 0)))
        action = jnp.pad(action, ((0, pad), (0, 0)))

    full = lambda shape: pl.BlockSpec(shape, lambda i: (0, 0))

    out = pl.pallas_call(
        reward_kernel,
        out_shape=jax.ShapeDtypeStruct((Bp, 1), jnp.float32),
        grid_spec=pltpu.PrefetchScalarGridSpec(
            num_scalar_prefetch=0,
            grid=(num_tiles,),
            in_specs=[
                pl.BlockSpec((tile, obs_dim), lambda i: (i, 0)),   # obs
                pl.BlockSpec((tile, act_dim), lambda i: (i, 0)),   # act
                full((obs_dim, HIDDEN)),                           # w1_obs
                full((act_dim, HIDDEN)),                           # w1_act
                full((3, HIDDEN)),                                 # b1/g1/be1
                full((HIDDEN, HIDDEN)),                            # w2
                full((3, HIDDEN)),                                 # b2/g2/be2
                full((1, HIDDEN)),                                 # w3 (row)
                full((1, 1)),                                      # b3
            ],
            out_specs=pl.BlockSpec((tile, 1), lambda i: (i, 0)),
        ),
        compiler_params=pltpu.CompilerParams(
            dimension_semantics=("parallel",)),
    )(observation, action, w1_obs, w1_act, p1, w2, p2, w3_row, b3_2d)

    return out[:B, 0]


def init_params(key, obs_dim, act_dim):
    """Deterministic synthetic parameters with the module's shapes (x @ W layout)."""
    num_inputs = obs_dim + act_dim
    ks = jax.random.split(key, 6)

    def linear(kw, kb, fan_in, fan_out):
        bound = 1.0 / jnp.sqrt(float(fan_in))
        w = jax.random.uniform(kw, (fan_in, fan_out), jnp.float32, -bound, bound)
        b = jax.random.uniform(kb, (fan_out,), jnp.float32, -bound, bound)
        return w, b

    w1, b1 = linear(ks[0], ks[1], num_inputs, HIDDEN)
    w2, b2 = linear(ks[2], ks[3], HIDDEN, HIDDEN)
    w3, b3 = linear(ks[4], ks[5], HIDDEN, 1)

    g1 = jnp.ones((HIDDEN,), jnp.float32)
    be1 = jnp.zeros((HIDDEN,), jnp.float32)
    g2 = jnp.ones((HIDDEN,), jnp.float32)
    be2 = jnp.zeros((HIDDEN,), jnp.float32)

    return (w1, b1, g1, be1, w2, b2, g2, be2, w3, b3)


def reference(observation, action, params):
    """Pure-JAX reference (concat form, matches the PyTorch module)."""
    (w1, b1, g1, be1, w2, b2, g2, be2, w3, b3) = params
    x = jnp.concatenate([observation, action], axis=-1)
    h = x @ w1 + b1
    h = _gelu_exact(_layernorm(h, g1, be1))
    h = h @ w2 + b2
    h = _gelu_exact(_layernorm(h, g2, be2))
    r = h @ w3 + b3.reshape(1, 1)
    return jnp.squeeze(r, axis=-1)


if __name__ == "__main__":
    key = jax.random.PRNGKey(0)
    k_obs, k_act, k_param = jax.random.split(key, 3)

    obs_dim, act_dim = 16, 8
    params = init_params(k_param, obs_dim, act_dim)

    run = jax.jit(functools.partial(continuous_mlp_reward, batch_tile=256))

    # Small primary check (single grid step).
    batch = 8
    observation = jax.random.normal(k_obs, (batch, obs_dim), jnp.float32)
    action = jax.random.normal(k_act, (batch, act_dim), jnp.float32)
    out = jax.block_until_ready(run(observation, action, params))
    ref = reference(observation, action, params)
    assert out.shape == (batch,), out.shape
    assert jnp.allclose(out, ref, atol=5e-5, rtol=1e-5), (out, ref)

    # Secondary check: ragged batch -> padding path + >=2 parallel grid steps.
    batch2 = 300
    obs2 = jax.random.normal(k_obs, (batch2, obs_dim), jnp.float32)
    act2 = jax.random.normal(k_act, (batch2, act_dim), jnp.float32)
    out2 = jax.block_until_ready(run(obs2, act2, params))
    ref2 = reference(obs2, act2, params)
    assert out2.shape == (batch2,), out2.shape
    assert jnp.allclose(out2, ref2, atol=5e-5, rtol=1e-5)

    print("KERNEL_OK")
</pallas_src>

<mosaic_0001>
module attributes {stable_mosaic.version = 11 : i64} {
  func.func @reward_kernel(%arg0: i32, %arg1: memref<8x16xf32, #tpu.memory_space<vmem>>, %arg2: memref<8x8xf32, #tpu.memory_space<vmem>>, %arg3: memref<16x256xf32, #tpu.memory_space<vmem>>, %arg4: memref<8x256xf32, #tpu.memory_space<vmem>>, %arg5: memref<3x256xf32, #tpu.memory_space<vmem>>, %arg6: memref<256x256xf32, #tpu.memory_space<vmem>>, %arg7: memref<3x256xf32, #tpu.memory_space<vmem>>, %arg8: memref<1x256xf32, #tpu.memory_space<vmem>>, %arg9: memref<1x1xf32, #tpu.memory_space<vmem>>, %arg10: memref<8x1xf32, #tpu.memory_space<vmem>>) attributes {dimension_semantics = [#tpu.dimension_semantics<parallel>], iteration_bounds = array<i64: 1>, scalar_prefetch = 0 : i64, scratch_operands = 0 : i64, tpu.core_type = #tpu.core_type<tc>, window_params = [{transform_indices = @transform_0, window_bounds = array<i64: 8, 16>}, {transform_indices = @transform_1, window_bounds = array<i64: 8, 8>}, {pipeline_mode = #tpu.pipeline_mode<synchronous>, transform_indices = @transform_2, window_bounds = array<i64: 16, 256>}, {pipeline_mode = #tpu.pipeline_mode<synchronous>, transform_indices = @transform_3, window_bounds = array<i64: 8, 256>}, {pipeline_mode = #tpu.pipeline_mode<synchronous>, transform_indices = @transform_4, window_bounds = array<i64: 3, 256>}, {pipeline_mode = #tpu.pipeline_mode<synchronous>, transform_indices = @transform_5, window_bounds = array<i64: 256, 256>}, {pipeline_mode = #tpu.pipeline_mode<synchronous>, transform_indices = @transform_6, window_bounds = array<i64: 3, 256>}, {pipeline_mode = #tpu.pipeline_mode<synchronous>, transform_indices = @transform_7, window_bounds = array<i64: 1, 256>}, {pipeline_mode = #tpu.pipeline_mode<synchronous>, transform_indices = @transform_8, window_bounds = array<i64: 1, 1>}, {transform_indices = @transform_9, window_bounds = array<i64: 8, 1>}]} {
    %c0 = arith.constant 0 : index
    %c0_0 = arith.constant 0 : index
    %0 = vector.load %arg1[%c0, %c0_0] : memref<8x16xf32, #tpu.memory_space<vmem>>, vector<8x16xf32>
    %c0_1 = arith.constant 0 : index
    %c0_2 = arith.constant 0 : index
    %1 = vector.load %arg2[%c0_1, %c0_2] : memref<8x8xf32, #tpu.memory_space<vmem>>, vector<8x8xf32>
    %c0_3 = arith.constant 0 : index
    %c0_4 = arith.constant 0 : index
    %2 = vector.load %arg3[%c0_3, %c0_4] : memref<16x256xf32, #tpu.memory_space<vmem>>, vector<16x256xf32>
    %cst = arith.constant dense<0.000000e+00> : vector<8x256xf32>
    %3 = tpu.matmul %0, %2, %cst {dimension_numbers = #tpu.dot_dimension_numbers<[1], [0], [0], [1], [0, 0, 1, 1], [], []>} : vector<8x16xf32>, vector<16x256xf32>, vector<8x256xf32> -> vector<8x256xf32>
    %c0_5 = arith.constant 0 : index
    %c0_6 = arith.constant 0 : index
    %4 = vector.load %arg4[%c0_5, %c0_6] : memref<8x256xf32, #tpu.memory_space<vmem>>, vector<8x256xf32>
    %cst_7 = arith.constant dense<0.000000e+00> : vector<8x256xf32>
    %5 = tpu.matmul %1, %4, %cst_7 {dimension_numbers = #tpu.dot_dimension_numbers<[1], [0], [0], [1], [0, 0, 1, 1], [], []>} : vector<8x8xf32>, vector<8x256xf32>, vector<8x256xf32> -> vector<8x256xf32>
    %6 = arith.addf %3, %5 : vector<8x256xf32>
    %c0_8 = arith.constant 0 : index
    %c0_9 = arith.constant 0 : index
    %7 = vector.load %arg5[%c0_8, %c0_9] : memref<3x256xf32, #tpu.memory_space<vmem>>, vector<1x256xf32>
    %8 = vector.broadcast %7 : vector<1x256xf32> to vector<8x256xf32>
    %9 = arith.addf %6, %8 : vector<8x256xf32>
    %c1 = arith.constant 1 : index
    %c0_10 = arith.constant 0 : index
    %10 = vector.load %arg5[%c1, %c0_10] : memref<3x256xf32, #tpu.memory_space<vmem>>, vector<1x256xf32>
    %c2 = arith.constant 2 : index
    %c0_11 = arith.constant 0 : index
    %11 = vector.load %arg5[%c2, %c0_11] : memref<3x256xf32, #tpu.memory_space<vmem>>, vector<1x256xf32>
    %cst_12 = arith.constant dense<0.000000e+00> : vector<8xf32>
    %12 = vector.multi_reduction <add>, %9, %cst_12 [1] : vector<8x256xf32> to vector<8xf32>
    %13 = vector.shape_cast %12 : vector<8xf32> to vector<8x1xf32>
    %cst_13 = arith.constant 2.560000e+02 : f32
    %14 = vector.broadcast %cst_13 : f32 to vector<8x1xf32>
    %15 = arith.divf %13, %14 : vector<8x1xf32>
    %16 = vector.broadcast %15 : vector<8x1xf32> to vector<8x256xf32>
    %17 = arith.subf %9, %16 : vector<8x256xf32>
    %18 = arith.mulf %17, %17 : vector<8x256xf32>
    %cst_14 = arith.constant dense<0.000000e+00> : vector<8xf32>
    %19 = vector.multi_reduction <add>, %18, %cst_14 [1] : vector<8x256xf32> to vector<8xf32>
    %20 = vector.shape_cast %19 : vector<8xf32> to vector<8x1xf32>
    %cst_15 = arith.constant 2.560000e+02 : f32
    %21 = vector.broadcast %cst_15 : f32 to vector<8x1xf32>
    %22 = arith.divf %20, %21 : vector<8x1xf32>
    %cst_16 = arith.constant 9.99999974E-6 : f32
    %23 = vector.broadcast %cst_16 : f32 to vector<8x1xf32>
    %24 = arith.addf %22, %23 : vector<8x1xf32>
    %25 = math.rsqrt %24 : vector<8x1xf32>
    %26 = vector.broadcast %15 : vector<8x1xf32> to vector<8x256xf32>
    %27 = arith.subf %9, %26 : vector<8x256xf32>
    %28 = vector.broadcast %25 : vector<8x1xf32> to vector<8x256xf32>
    %29 = arith.mulf %27, %28 : vector<8x256xf32>
    %30 = vector.broadcast %10 : vector<1x256xf32> to vector<8x256xf32>
    %31 = arith.mulf %29, %30 : vector<8x256xf32>
    %32 = vector.broadcast %11 : vector<1x256xf32> to vector<8x256xf32>
    %33 = arith.addf %31, %32 : vector<8x256xf32>
    %cst_17 = arith.constant 5.000000e-01 : f32
    %34 = vector.broadcast %cst_17 : f32 to vector<8x256xf32>
    %35 = arith.mulf %34, %33 : vector<8x256xf32>
    %cst_18 = arith.constant 2.000000e+00 : f32
    %36 = math.sqrt %cst_18 : f32
    %cst_19 = arith.constant 1.000000e+00 : f32
    %37 = arith.divf %cst_19, %36 : f32
    %38 = vector.broadcast %37 : f32 to vector<8x256xf32>
    %39 = arith.mulf %33, %38 : vector<8x256xf32>
    %40 = math.erf %39 : vector<8x256xf32>
    %cst_20 = arith.constant 1.000000e+00 : f32
    %41 = vector.broadcast %cst_20 : f32 to vector<8x256xf32>
    %42 = arith.addf %41, %40 : vector<8x256xf32>
    %43 = arith.mulf %35, %42 : vector<8x256xf32>
    %c0_21 = arith.constant 0 : index
    %c0_22 = arith.constant 0 : index
    %44 = vector.load %arg6[%c0_21, %c0_22] : memref<256x256xf32, #tpu.memory_space<vmem>>, vector<256x256xf32>
    %cst_23 = arith.constant dense<0.000000e+00> : vector<8x256xf32>
    %45 = tpu.matmul %43, %44, %cst_23 {dimension_numbers = #tpu.dot_dimension_numbers<[1], [0], [0], [1], [0, 0, 1, 1], [], []>} : vector<8x256xf32>, vector<256x256xf32>, vector<8x256xf32> -> vector<8x256xf32>
    %c0_24 = arith.constant 0 : index
    %c0_25 = arith.constant 0 : index
    %46 = vector.load %arg7[%c0_24, %c0_25] : memref<3x256xf32, #tpu.memory_space<vmem>>, vector<1x256xf32>
    %47 = vector.broadcast %46 : vector<1x256xf32> to vector<8x256xf32>
    %48 = arith.addf %45, %47 : vector<8x256xf32>
    %c1_26 = arith.constant 1 : index
    %c0_27 = arith.constant 0 : index
    %49 = vector.load %arg7[%c1_26, %c0_27] : memref<3x256xf32, #tpu.memory_space<vmem>>, vector<1x256xf32>
    %c2_28 = arith.constant 2 : index
    %c0_29 = arith.constant 0 : index
    %50 = vector.load %arg7[%c2_28, %c0_29] : memref<3x256xf32, #tpu.memory_space<vmem>>, vector<1x256xf32>
    %cst_30 = arith.constant dense<0.000000e+00> : vector<8xf32>
    %51 = vector.multi_reduction <add>, %48, %cst_30 [1] : vector<8x256xf32> to vector<8xf32>
    %52 = vector.shape_cast %51 : vector<8xf32> to vector<8x1xf32>
    %cst_31 = arith.constant 2.560000e+02 : f32
    %53 = vector.broadcast %cst_31 : f32 to vector<8x1xf32>
    %54 = arith.divf %52, %53 : vector<8x1xf32>
    %55 = vector.broadcast %54 : vector<8x1xf32> to vector<8x256xf32>
    %56 = arith.subf %48, %55 : vector<8x256xf32>
    %57 = arith.mulf %56, %56 : vector<8x256xf32>
    %cst_32 = arith.constant dense<0.000000e+00> : vector<8xf32>
    %58 = vector.multi_reduction <add>, %57, %cst_32 [1] : vector<8x256xf32> to vector<8xf32>
    %59 = vector.shape_cast %58 : vector<8xf32> to vector<8x1xf32>
    %cst_33 = arith.constant 2.560000e+02 : f32
    %60 = vector.broadcast %cst_33 : f32 to vector<8x1xf32>
    %61 = arith.divf %59, %60 : vector<8x1xf32>
    %cst_34 = arith.constant 9.99999974E-6 : f32
    %62 = vector.broadcast %cst_34 : f32 to vector<8x1xf32>
    %63 = arith.addf %61, %62 : vector<8x1xf32>
    %64 = math.rsqrt %63 : vector<8x1xf32>
    %65 = vector.broadcast %54 : vector<8x1xf32> to vector<8x256xf32>
    %66 = arith.subf %48, %65 : vector<8x256xf32>
    %67 = vector.broadcast %64 : vector<8x1xf32> to vector<8x256xf32>
    %68 = arith.mulf %66, %67 : vector<8x256xf32>
    %69 = vector.broadcast %49 : vector<1x256xf32> to vector<8x256xf32>
    %70 = arith.mulf %68, %69 : vector<8x256xf32>
    %71 = vector.broadcast %50 : vector<1x256xf32> to vector<8x256xf32>
    %72 = arith.addf %70, %71 : vector<8x256xf32>
    %cst_35 = arith.constant 5.000000e-01 : f32
    %73 = vector.broadcast %cst_35 : f32 to vector<8x256xf32>
    %74 = arith.mulf %73, %72 : vector<8x256xf32>
    %cst_36 = arith.constant 2.000000e+00 : f32
    %75 = math.sqrt %cst_36 : f32
    %cst_37 = arith.constant 1.000000e+00 : f32
    %76 = arith.divf %cst_37, %75 : f32
    %77 = vector.broadcast %76 : f32 to vector<8x256xf32>
    %78 = arith.mulf %72, %77 : vector<8x256xf32>
    %79 = math.erf %78 : vector<8x256xf32>
    %cst_38 = arith.constant 1.000000e+00 : f32
    %80 = vector.broadcast %cst_38 : f32 to vector<8x256xf32>
    %81 = arith.addf %80, %79 : vector<8x256xf32>
    %82 = arith.mulf %74, %81 : vector<8x256xf32>
    %c0_39 = arith.constant 0 : index
    %c0_40 = arith.constant 0 : index
    %83 = vector.load %arg8[%c0_39, %c0_40] : memref<1x256xf32, #tpu.memory_space<vmem>>, vector<1x256xf32>
    %84 = vector.broadcast %83 : vector<1x256xf32> to vector<8x256xf32>
    %85 = arith.mulf %82, %84 : vector<8x256xf32>
    %cst_41 = arith.constant dense<0.000000e+00> : vector<8xf32>
    %86 = vector.multi_reduction <add>, %85, %cst_41 [1] : vector<8x256xf32> to vector<8xf32>
    %87 = vector.shape_cast %86 : vector<8xf32> to vector<8x1xf32>
    %c0_42 = arith.constant 0 : index
    %c0_43 = arith.constant 0 : index
    %88 = vector.load %arg9[%c0_42, %c0_43] : memref<1x1xf32, #tpu.memory_space<vmem>>, vector<1x1xf32>
    %89 = vector.broadcast %88 : vector<1x1xf32> to vector<8x1xf32>
    %90 = arith.addf %87, %89 : vector<8x1xf32>
    %c0_44 = arith.constant 0 : index
    %c0_45 = arith.constant 0 : index
    %91 = vector.load %arg10[%c0_44, %c0_45] : memref<8x1xf32, #tpu.memory_space<vmem>>, vector<8x1xf32>
    tpu.vector_store %arg10[%c0_44, %c0_45], %90 {strides = array<i32>} : memref<8x1xf32, #tpu.memory_space<vmem>>, vector<8x1xf32>,
    return
  }
  func.func @transform_0(%arg0: i32) -> (i32, i32) {
    %c0_i32 = arith.constant 0 : i32
    %c0_i32_0 = arith.constant 0 : i32
    return %arg0, %c0_i32 : i32, i32
  }
  func.func @transform_1(%arg0: i32) -> (i32, i32) {
    %c0_i32 = arith.constant 0 : i32
    %c0_i32_0 = arith.constant 0 : i32
    return %arg0, %c0_i32 : i32, i32
  }
  func.func @transform_2(%arg0: i32) -> (i32, i32) {
    %c0_i32 = arith.constant 0 : i32
    %c0_i32_0 = arith.constant 0 : i32
    %c0_i32_1 = arith.constant 0 : i32
    return %c0_i32, %c0_i32_0 : i32, i32
  }
  func.func @transform_3(%arg0: i32) -> (i32, i32) {
    %c0_i32 = arith.constant 0 : i32
    %c0_i32_0 = arith.constant 0 : i32
    %c0_i32_1 = arith.constant 0 : i32
    return %c0_i32, %c0_i32_0 : i32, i32
  }
  func.func @transform_4(%arg0: i32) -> (i32, i32) {
    %c0_i32 = arith.constant 0 : i32
    %c0_i32_0 = arith.constant 0 : i32
    %c0_i32_1 = arith.constant 0 : i32
    return %c0_i32, %c0_i32_0 : i32, i32
  }
  func.func @transform_5(%arg0: i32) -> (i32, i32) {
    %c0_i32 = arith.constant 0 : i32
    %c0_i32_0 = arith.constant 0 : i32
    %c0_i32_1 = arith.constant 0 : i32
    return %c0_i32, %c0_i32_0 : i32, i32
  }
  func.func @transform_6(%arg0: i32) -> (i32, i32) {
    %c0_i32 = arith.constant 0 : i32
    %c0_i32_0 = arith.constant 0 : i32
    %c0_i32_1 = arith.constant 0 : i32
    return %c0_i32, %c0_i32_0 : i32, i32
  }
  func.func @transform_7(%arg0: i32) -> (i32, i32) {
    %c0_i32 = arith.constant 0 : i32
    %c0_i32_0 = arith.constant 0 : i32
    %c0_i32_1 = arith.constant 0 : i32
    return %c0_i32, %c0_i32_0 : i32, i32
  }
  func.func @transform_8(%arg0: i32) -> (i32, i32) {
    %c0_i32 = arith.constant 0 : i32
    %c0_i32_0 = arith.constant 0 : i32
    %c0_i32_1 = arith.constant 0 : i32
    return %c0_i32, %c0_i32_0 : i32, i32
  }
  func.func @transform_9(%arg0: i32) -> (i32, i32) {
    %c0_i32 = arith.constant 0 : i32
    %c0_i32_0 = arith.constant 0 : i32
    return %arg0, %c0_i32 : i32, i32
  }
}

</mosaic_0001>

<llo_original>
// kernel: continuous_mlp_reward.1
$region0: #{continuous_mlp_reward.1}
  #allocation0 [shape = 'u32[]', space=smem, size = 0x4, offset = 0x4, fixed_abs, tag = 'smem constant byte address 0x4 - core index']
  #allocation1 [shape = 'u32[144,128]{1,0:T(1,128)}', space=vmem, size = 0x12000, scoped, tag = 'internal scratch']
  #allocation2 [shape = 'f32[1,1]{1,0:T(1,128)S(1)}', space=vmem, size = 0x200, scoped, tag = 'scoped memory for continuous_mlp_reward.1']
  %s0 = inlined_call_operand.vmem [shape: f32[8,16], index: 0, kind: input, shape index: {}]
  %s1 = inlined_call_operand.vmem [shape: f32[8,8], index: 1, kind: input, shape index: {}]
  %s2 = inlined_call_operand.vmem [shape: f32[16,256], index: 2, kind: input, shape index: {}]
  %s3 = inlined_call_operand.vmem [shape: f32[8,256], index: 3, kind: input, shape index: {}]
  %s4 = inlined_call_operand.vmem [shape: f32[3,256], index: 4, kind: input, shape index: {}]
  %s5 = inlined_call_operand.hbm [shape: f32[256,256], index: 5, kind: input, shape index: {}]
  %s6 = inlined_call_operand.vmem [shape: f32[3,256], index: 6, kind: input, shape index: {}]
  %s7 = inlined_call_operand.vmem [shape: f32[1,256], index: 7, kind: input, shape index: {}]
  %s8 = inlined_call_operand.<no memory space> [shape: f32[1,1], index: 8, kind: input, shape index: {}]
  %s9 = inlined_call_operand.vmem [shape: f32[8,1], index: 9, kind: output, shape index: {}]
  %s10 = sld [smem:[#allocation0]]
  $region50: #{continuous_mlp_reward.1} parent=0
    _
  %s12 = ssub.s32 1, %s10
  %s13 = scalar_select 0, %s12, %s10
  %v14 = vstv %s8
  %15 = vst [vmem:[#allocation2] sm:$0x1] %v14
  $region1: #{continuous_mlp_reward.1} parent=0
    #allocation3 [shape = 'u8[262144]{0}', space=vmem, size = 0x40000, scoped, tag = 'input window, operand 5, single buffered']
    #allocation4 [shape = 's32[1]{0}', space=sflag, size = 0x4, scoped, tag = 'scoped memory for continuous_mlp_reward.1']
    %16 = vsyncpa [#allocation4], 0
    // Predicated region
    $region2: #{continuous_mlp_reward.1} parent=1 // pred_check
      _
    $region3: #{continuous_mlp_reward.1} parent=1 // pred_check_branch
      %18 = sbr.rel (0) target = $region5
    $region4: #{continuous_mlp_reward.1} parent=1 // pred_region
      _
    $region5: #{continuous_mlp_reward.1} parent=1 // pred_fallthru
      _
    // Predicated region
    $region6: #{continuous_mlp_reward.1} parent=1 // pred_check
      _
    $region7: #{continuous_mlp_reward.1} parent=1 // pred_check_branch
      %20 = sbr.rel (0) target = $region9
    $region8: #{continuous_mlp_reward.1} parent=1 // pred_region
      _
    $region9: #{continuous_mlp_reward.1} parent=1 // pred_fallthru
      _
    // Predicated region
    $region10: #{continuous_mlp_reward.1} parent=1 // pred_check
      _
    $region11: #{continuous_mlp_reward.1} parent=1 // pred_check_branch
      %22 = sbr.rel (0) target = $region13
    $region12: #{continuous_mlp_reward.1} parent=1 // pred_region
      _
    $region13: #{continuous_mlp_reward.1} parent=1 // pred_fallthru
      _
    // Predicated region
    $region14: #{continuous_mlp_reward.1} parent=1 // pred_check
      _
    $region15: #{continuous_mlp_reward.1} parent=1 // pred_check_branch
      %24 = sbr.rel (0) target = $region17
    $region16: #{continuous_mlp_reward.1} parent=1 // pred_region
      _
    $region17: #{continuous_mlp_reward.1} parent=1 // pred_fallthru
      _
    // Predicated region
    $region18: #{continuous_mlp_reward.1} parent=1 // pred_check
      _
    $region19: #{continuous_mlp_reward.1} parent=1 // pred_check_branch
      %26 = sbr.rel (0) target = $region21
    $region20: #{continuous_mlp_reward.1} parent=1 // pred_region
      _
    $region21: #{continuous_mlp_reward.1} parent=1 // pred_fallthru
      _
    // Predicated region
    $region22: #{continuous_mlp_reward.1} parent=1 // pred_check
      _
    $region23: #{continuous_mlp_reward.1} parent=1 // pred_check_branch
      %28 = sbr.rel (0) target = $region25
    $region24: #{continuous_mlp_reward.1} parent=1 // pred_region
      %s30 = ssub.s32 8192, 8192
      %31 = vsyncadd [#allocation4], %s30
      %s32 = sshll.u32 [#allocation3], 4
      %s33 = int_to_ptr.vmem [resolvable:$true] %s32
      %38 = dma.hbm_to_vmem [thread:$0]  %s5, 8192, %s33, [#allocation4], 256, 256, 16
    $region25: #{continuous_mlp_reward.1} parent=1 // pred_fallthru
      _
    // Predicated region
    $region26: #{continuous_mlp_reward.1} parent=1 // pred_check
      _
    $region27: #{continuous_mlp_reward.1} parent=1 // pred_check_branch
      %40 = sbr.rel (0) target = $region29
    $region28: #{continuous_mlp_reward.1} parent=1 // pred_region
      _
    $region29: #{continuous_mlp_reward.1} parent=1 // pred_fallthru
      _
    // Predicated region
    $region30: #{continuous_mlp_reward.1} parent=1 // pred_check
      _
    $region31: #{continuous_mlp_reward.1} parent=1 // pred_check_branch
      %42 = sbr.rel (0) target = $region33
    $region32: #{continuous_mlp_reward.1} parent=1 // pred_region
      _
    $region33: #{continuous_mlp_reward.1} parent=1 // pred_fallthru
      _
    // Predicated region
    $region34: #{continuous_mlp_reward.1} parent=1 // pred_check
      _
    $region35: #{continuous_mlp_reward.1} parent=1 // pred_check_branch
      %44 = sbr.rel (0) target = $region37
    $region36: #{continuous_mlp_reward.1} parent=1 // pred_region
      _
    $region37: #{continuous_mlp_reward.1} parent=1 // pred_fallthru
      _
    // Predicated region
    $region38: #{continuous_mlp_reward.1} parent=1 // pred_check
      _
    $region39: #{continuous_mlp_reward.1} parent=1 // pred_check_branch
      %46 = sbr.rel (0) target = $region41
    $region40: #{continuous_mlp_reward.1} parent=1 // pred_region
      %47 = dma.done [#allocation4], 8192
    $region41: #{continuous_mlp_reward.1} parent=1 // pred_fallthru
      _
    %v48 = vld [vmem:[%s0] sm:$0xff]
    %v49 = vld [vmem:[%s1] sm:$0xff]
    %v50 = vld [vmem:[%s2] sm:$0xff]
    %v51 = vld [vmem:[%s2 + $0x8] sm:$0xff]
    %v52 = vld [vmem:[%s2 + $0x10] sm:$0xff]
    %v53 = vld [vmem:[%s2 + $0x18] sm:$0xff]
    %v54 = vld [vmem:[%s3] sm:$0xff]
    %v55 = vld [vmem:[%s3 + $0x8] sm:$0xff]
    %vm56 = vcmask 64512
    %v58 = vsel %vm56, %v49, 0
    %60 = vmatprep.subr.mxu0 0.0
    %61 = vmatpush1.msra.mxu0 0.0
    %62 = vmatprep.subr.mxu0 0.0
    %63 = vmatpush1.msra.mxu0 0.0
    %64 = vmatprep.subr.mxu0 0.0
    %65 = vmatpush1.msra.mxu0 0.0
    %66 = vmatprep.subr.mxu0 0.0
    %67 = vmatpush1.msra.mxu0 0.0
    %68 = vmatprep.subr.mxu0 0.0
    %69 = vmatpush1.msra.mxu0 0.0
    %70 = vmatprep.subr.mxu0 0.0
    %71 = vmatpush1.msra.mxu0 0.0
    %72 = vmatprep.subr.mxu0 0.0
    %73 = vmatpush1.msra.mxu0 0.0
    %74 = vmatprep.subr.mxu0 0.0
    %75 = vmatpush1.msra.mxu0 0.0
    %76 = vmatprep.subr.mxu0 0.0
    %77 = vmatpush1.msra.mxu0 0.0
    %78 = vmatprep.subr.mxu0 0.0
    %79 = vmatpush1.msra.mxu0 0.0
    %80 = vmatprep.subr.mxu0 0.0
    %81 = vmatpush1.msra.mxu0 0.0
    %82 = vmatprep.subr.mxu0 0.0
    %83 = vmatpush1.msra.mxu0 0.0
    %84 = vmatprep.subr.mxu0 0.0
    %85 = vmatpush1.msra.mxu0 0.0
    %86 = vmatprep.subr.mxu0 0.0
    %87 = vmatpush1.msra.mxu0 0.0
    %88 = vmatprep.subr.mxu0 0.0
    %89 = vmatpush1.msra.mxu0 0.0
    %90 = vmatprep.subr.mxu0 %v55
    %91 = vmatpush1.msra.mxu0 %v54
    %92 = vmatprep.subr.mxu0 0.0
    %93 = vmatpush2.msra.mxu0 0.0
    %94 = vmatprep.subr.mxu0 0.0
    %95 = vmatpush2.msra.mxu0 0.0
    %96 = vmatprep.subr.mxu0 0.0
    %97 = vmatpush2.msra.mxu0 0.0
    %98 = vmatprep.subr.mxu0 0.0
    %99 = vmatpush2.msra.mxu0 0.0
    %100 = vmatprep.subr.mxu0 0.0
    %101 = vmatpush2.msra.mxu0 0.0
    %102 = vmatprep.subr.mxu0 0.0
    %103 = vmatpush2.msra.mxu0 0.0
    %104 = vmatprep.subr.mxu0 0.0
    %105 = vmatpush2.msra.mxu0 0.0
    %106 = vmatprep.subr.mxu0 0.0
    %107 = vmatpush2.msra.mxu0 0.0
    %108 = vmatprep.subr.mxu0 0.0
    %109 = vmatpush2.msra.mxu0 0.0
    %110 = vmatprep.subr.mxu0 0.0
    %111 = vmatpush2.msra.mxu0 0.0
    %112 = vmatprep.subr.mxu0 0.0
    %113 = vmatpush2.msra.mxu0 0.0
    %114 = vmatprep.subr.mxu0 0.0
    %115 = vmatpush2.msra.mxu0 0.0
    %116 = vmatprep.subr.mxu0 0.0
    %117 = vmatpush2.msra.mxu0 0.0
    %118 = vmatprep.subr.mxu0 0.0
    %119 = vmatpush2.msra.mxu0 0.0
    %120 = vmatprep.subr.mxu0 0.0
    %121 = vmatpush2.msra.mxu0 0.0
    %122 = vmatprep.subr.mxu0 0.0
    %123 = vmatpush2.msra.mxu0 0.0
    %124 = vmatprep.mubr.f32.mxu0 0.0
    %125 = vmatmul.mubr.f32.gmra.mxu0 %v58
    %v126 = vpop.f32.mrf.mxu0
    %v127 = vadd.f32 0.0, %v126
    %v128 = vpop.f32.mrf.mxu0
    %v129 = vadd.f32 0.0, %v128
    %130 = vdwg.mxu0
    %vm131 = vcmask 130048
    %v133 = vsel %vm131, %v48, 0
    %135 = vmatprep.subr.mxu0 0.0
    %136 = vmatpush1.msra.mxu0 0.0
    %137 = vmatprep.subr.mxu0 0.0
    %138 = vmatpush1.msra.mxu0 0.0
    %139 = vmatprep.subr.mxu0 0.0
    %140 = vmatpush1.msra.mxu0 0.0
    %141 = vmatprep.subr.mxu0 0.0
    %142 = vmatpush1.msra.mxu0 0.0
    %143 = vmatprep.subr.mxu0 0.0
    %144 = vmatpush1.msra.mxu0 0.0
    %145 = vmatprep.subr.mxu0 0.0
    %146 = vmatpush1.msra.mxu0 0.0
    %147 = vmatprep.subr.mxu0 0.0
    %148 = vmatpush1.msra.mxu0 0.0
    %149 = vmatprep.subr.mxu0 0.0
    %150 = vmatpush1.msra.mxu0 0.0
    %151 = vmatprep.subr.mxu0 0.0
    %152 = vmatpush1.msra.mxu0 0.0
    %153 = vmatprep.subr.mxu0 0.0
    %154 = vmatpush1.msra.mxu0 0.0
    %155 = vmatprep.subr.mxu0 0.0
    %156 = vmatpush1.msra.mxu0 0.0
    %157 = vmatprep.subr.mxu0 0.0
    %158 = vmatpush1.msra.mxu0 0.0
    %159 = vmatprep.subr.mxu0 0.0
    %160 = vmatpush1.msra.mxu0 0.0
    %161 = vmatprep.subr.mxu0 0.0
    %162 = vmatpush1.msra.mxu0 0.0
    %163 = vmatprep.subr.mxu0 %v53
    %164 = vmatpush1.msra.mxu0 %v52
    %165 = vmatprep.subr.mxu0 %v51
    %166 = vmatpush1.msra.mxu0 %v50
    %167 = vmatprep.subr.mxu0 0.0
    %168 = vmatpush2.msra.mxu0 0.0
    %169 = vmatprep.subr.mxu0 0.0
    %170 = vmatpush2.msra.mxu0 0.0
    %171 = vmatprep.subr.mxu0 0.0
    %172 = vmatpush2.msra.mxu0 0.0
    %173 = vmatprep.subr.mxu0 0.0
    %174 = vmatpush2.msra.mxu0 0.0
    %175 = vmatprep.subr.mxu0 0.0
    %176 = vmatpush2.msra.mxu0 0.0
    %177 = vmatprep.subr.mxu0 0.0
    %178 = vmatpush2.msra.mxu0 0.0
    %179 = vmatprep.subr.mxu0 0.0
    %180 = vmatpush2.msra.mxu0 0.0
    %181 = vmatprep.subr.mxu0 0.0
    %182 = vmatpush2.msra.mxu0 0.0
    %183 = vmatprep.subr.mxu0 0.0
    %184 = vmatpush2.msra.mxu0 0.0
    %185 = vmatprep.subr.mxu0 0.0
    %186 = vmatpush2.msra.mxu0 0.0
    %187 = vmatprep.subr.mxu0 0.0
    %188 = vmatpush2.msra.mxu0 0.0
    %189 = vmatprep.subr.mxu0 0.0
    %190 = vmatpush2.msra.mxu0 0.0
    %191 = vmatprep.subr.mxu0 0.0
    %192 = vmatpush2.msra.mxu0 0.0
    %193 = vmatprep.subr.mxu0 0.0
    %194 = vmatpush2.msra.mxu0 0.0
    %195 = vmatprep.subr.mxu0 0.0
    %196 = vmatpush2.msra.mxu0 0.0
    %197 = vmatprep.subr.mxu0 0.0
    %198 = vmatpush2.msra.mxu0 0.0
    %199 = vmatprep.mubr.f32.mxu0 0.0
    %200 = vmatmul.mubr.f32.gmra.mxu0 %v133
    %v201 = vpop.f32.mrf.mxu0
    %v202 = vadd.f32 %v127, %v201
    %v203 = vpop.f32.mrf.mxu0
    %v204 = vadd.f32 %v129, %v203
    %205 = vdwg.mxu0
    %v206 = vld [vmem:[%s4] ss:$4 sm:$0x3]
    %v208 = vlaneseq
    %v209 = vshrl.u32 %v208, 7
    %v210 = vsub.s32 0, %v209
    %v211 = vrot.slane %v206, %v210
    %v212 = vlaneseq
    %v213 = vshrl.u32 %v212, 7
    %v214 = vsub.s32 1, %v213
    %v215 = vrot.slane %v206, %v214
    %v218 = vadd.f32 %v202, %v211
    %v219 = vadd.f32 %v204, %v215
    %s220 = scalar_lea.vmem %s4, 1
    %v221 = vld [vmem:[%s220] ss:$4 sm:$0x3]
    %s222 = scalar_lea.vmem %s4, 2
    %v223 = vld [vmem:[%s222] ss:$4 sm:$0x3]
    %v224 = vadd.f32 %v218, %v219
    %225 = vadd.xlane.f32.xlu0 %v224
    %v226 = vpop.xlane.xlu0 %225
    %v227 = vrcp.pop 256.0
    %v228 = vmul.f32 %v226, %v227
    %v229 = vsub.f32 %v218, %v228
    %v230 = vsub.f32 %v219, %v228
    %v231 = vmul.f32 %v229, %v229
    %v232 = vmul.f32 %v230, %v230
    %v233 = vadd.f32 %v231, %v232
    %234 = vadd.xlane.f32.xlu0 %v233
    %v235 = vpop.xlane.xlu0 %234
    %v236 = vmul.f32 %v235, %v227
    %v237 = vadd.f32 %v236, 1e-05
    %v238 = vrsqrt.pop %v237
    %v239 = vmul.f32 %v229, %v238
    %v240 = vmul.f32 %v230, %v238
    %v242 = vlaneseq
    %v243 = vshrl.u32 %v242, 7
    %v244 = vsub.s32 0, %v243
    %v245 = vrot.slane %v221, %v244
    %v246 = vlaneseq
    %v247 = vshrl.u32 %v246, 7
    %v248 = vsub.s32 1, %v247
    %v249 = vrot.slane %v221, %v248
    %v252 = vmul.f32 %v239, %v245
    %v253 = vmul.f32 %v240, %v249
    %v255 = vlaneseq
    %v256 = vshrl.u32 %v255, 7
    %v257 = vsub.s32 0, %v256
    %v258 = vrot.slane %v223, %v257
    %v259 = vlaneseq
    %v260 = vshrl.u32 %v259, 7
    %v261 = vsub.s32 1, %v260
    %v262 = vrot.slane %v223, %v261
    %v265 = vadd.f32 %v252, %v258
    %v266 = vadd.f32 %v253, %v262
    %v267 = vmul.f32 %v265, 0.5
    %v268 = vmul.f32 %v266, 0.5
    %v269 = vmul.f32 %v265, 0.70710677
    %v270 = vmul.f32 %v266, 0.70710677
    %v271 = verf.f32.pop %v269
    %v272 = verf.f32.pop %v270
    %v273 = vadd.f32 %v271, 1.0
    %v274 = vadd.f32 %v272, 1.0
    %v275 = vmul.f32 %v267, %v273
    %v276 = vmul.f32 %v268, %v274
    %v277 = vld [vmem:[#allocation3] sm:$0xff]
    %v278 = vld [vmem:[#allocation3 + $0x8] sm:$0xff]
    %v279 = vld [vmem:[#allocation3 + $0x10] sm:$0xff]
    %v280 = vld [vmem:[#allocation3 + $0x18] sm:$0xff]
    %v281 = vld [vmem:[#allocation3 + $0x20] sm:$0xff]
    %v282 = vld [vmem:[#allocation3 + $0x28] sm:$0xff]
    %v283 = vld [vmem:[#allocation3 + $0x30] sm:$0xff]
    %v284 = vld [vmem:[#allocation3 + $0x38] sm:$0xff]
    %v285 = vld [vmem:[#allocation3 + $0x40] sm:$0xff]
    %v286 = vld [vmem:[#allocation3 + $0x48] sm:$0xff]
    %v287 = vld [vmem:[#allocation3 + $0x50] sm:$0xff]
    %v288 = vld [vmem:[#allocation3 + $0x58] sm:$0xff]
    %v289 = vld [vmem:[#allocation3 + $0x60] sm:$0xff]
    %v290 = vld [vmem:[#allocation3 + $0x68] sm:$0xff]
    %v291 = vld [vmem:[#allocation3 + $0x70] sm:$0xff]
    %v292 = vld [vmem:[#allocation3 + $0x78] sm:$0xff]
    %v293 = vld [vmem:[#allocation3 + $0x80] sm:$0xff]
    %v294 = vld [vmem:[#allocation3 + $0x88] sm:$0xff]
    %v295 = vld [vmem:[#allocation3 + $0x90] sm:$0xff]
    %v296 = vld [vmem:[#allocation3 + $0x98] sm:$0xff]
    %v297 = vld [vmem:[#allocation3 + $0xa0] sm:$0xff]
    %v298 = vld [vmem:[#allocation3 + $0xa8] sm:$0xff]
    %v299 = vld [vmem:[#allocation3 + $0xb0] sm:$0xff]
    %v300 = vld [vmem:[#allocation3 + $0xb8] sm:$0xff]
    %v301 = vld [vmem:[#allocation3 + $0xc0] sm:$0xff]
    %v302 = vld [vmem:[#allocation3 + $0xc8] sm:$0xff]
    %v303 = vld [vmem:[#allocation3 + $0xd0] sm:$0xff]
    %v304 = vld [vmem:[#allocation3 + $0xd8] sm:$0xff]
    %v305 = vld [vmem:[#allocation3 + $0xe0] sm:$0xff]
    %v306 = vld [vmem:[#allocation3 + $0xe8] sm:$0xff]
    %v307 = vld [vmem:[#allocation3 + $0xf0] sm:$0xff]
    %v308 = vld [vmem:[#allocation3 + $0xf8] sm:$0xff]
    %v309 = vld [vmem:[#allocation3 + $0x100] sm:$0xff]
    %v310 = vld [vmem:[#allocation3 + $0x108] sm:$0xff]
    %v311 = vld [vmem:[#allocation3 + $0x110] sm:$0xff]
    %v312 = vld [vmem:[#allocation3 + $0x118] sm:$0xff]
    %v313 = vld [vmem:[#allocation3 + $0x120] sm:$0xff]
    %v314 = vld [vmem:[#allocation3 + $0x128] sm:$0xff]
    %v315 = vld [vmem:[#allocation3 + $0x130] sm:$0xff]
    %v316 = vld [vmem:[#allocation3 + $0x138] sm:$0xff]
    %v317 = vld [vmem:[#allocation3 + $0x140] sm:$0xff]
    %v318 = vld [vmem:[#allocation3 + $0x148] sm:$0xff]
    %v319 = vld [vmem:[#allocation3 + $0x150] sm:$0xff]
    %v320 = vld [vmem:[#allocation3 + $0x158] sm:$0xff]
    %v321 = vld [vmem:[#allocation3 + $0x160] sm:$0xff]
    %v322 = vld [vmem:[#allocation3 + $0x168] sm:$0xff]
    %v323 = vld [vmem:[#allocation3 + $0x170] sm:$0xff]
    %v324 = vld [vmem:[#allocation3 + $0x178] sm:$0xff]
    %v325 = vld [vmem:[#allocation3 + $0x180] sm:$0xff]
    %v326 = vld [vmem:[#allocation3 + $0x188] sm:$0xff]
    %v327 = vld [vmem:[#allocation3 + $0x190] sm:$0xff]
    %v328 = vld [vmem:[#allocation3 + $0x198] sm:$0xff]
    %v329 = vld [vmem:[#allocation3 + $0x1a0] sm:$0xff]
    %v330 = vld [vmem:[#allocation3 + $0x1a8] sm:$0xff]
    %v331 = vld [vmem:[#allocation3 + $0x1b0] sm:$0xff]
    %v332 = vld [vmem:[#allocation3 + $0x1b8] sm:$0xff]
    %v333 = vld [vmem:[#allocation3 + $0x1c0] sm:$0xff]
    %v334 = vld [vmem:[#allocation3 + $0x1c8] sm:$0xff]
    %v335 = vld [vmem:[#allocation3 + $0x1d0] sm:$0xff]
    %v336 = vld [vmem:[#allocation3 + $0x1d8] sm:$0xff]
    %v337 = vld [vmem:[#allocation3 + $0x1e0] sm:$0xff]
    %v338 = vld [vmem:[#allocation3 + $0x1e8] sm:$0xff]
    %v339 = vld [vmem:[#allocation3 + $0x1f0] sm:$0xff]
    %v340 = vld [vmem:[#allocation3 + $0x1f8] sm:$0xff]
    %v341 = vld [vmem:[%s6] ss:$4 sm:$0x3]
    %v343 = vlaneseq
    %v344 = vshrl.u32 %v343, 7
    %v345 = vsub.s32 0, %v344
    %v346 = vrot.slane %v341, %v345
    %v347 = vlaneseq
    %v348 = vshrl.u32 %v347, 7
    %v349 = vsub.s32 1, %v348
    %v350 = vrot.slane %v341, %v349
    %353 = vmatprep.subr.mxu0 %v308
    %354 = vmatpush1.msra.mxu0 %v307
    %355 = vmatprep.subr.mxu0 %v306
    %356 = vmatpush1.msra.mxu0 %v305
    %357 = vmatprep.subr.mxu0 %v304
    %358 = vmatpush1.msra.mxu0 %v303
    %359 = vmatprep.subr.mxu0 %v302
    %360 = vmatpush1.msra.mxu0 %v301
    %361 = vmatprep.subr.mxu0 %v300
    %362 = vmatpush1.msra.mxu0 %v299
    %363 = vmatprep.subr.mxu0 %v298
    %364 = vmatpush1.msra.mxu0 %v297
    %365 = vmatprep.subr.mxu0 %v296
    %366 = vmatpush1.msra.mxu0 %v295
    %367 = vmatprep.subr.mxu0 %v294
    %368 = vmatpush1.msra.mxu0 %v293
    %369 = vmatprep.subr.mxu0 %v292
    %370 = vmatpush1.msra.mxu0 %v291
    %371 = vmatprep.subr.mxu0 %v290
    %372 = vmatpush1.msra.mxu0 %v289
    %373 = vmatprep.subr.mxu0 %v288
    %374 = vmatpush1.msra.mxu0 %v287
    %375 = vmatprep.subr.mxu0 %v286
    %376 = vmatpush1.msra.mxu0 %v285
    %377 = vmatprep.subr.mxu0 %v284
    %378 = vmatpush1.msra.mxu0 %v283
    %379 = vmatprep.subr.mxu0 %v282
    %380 = vmatpush1.msra.mxu0 %v281
    %381 = vmatprep.subr.mxu0 %v280
    %382 = vmatpush1.msra.mxu0 %v279
    %383 = vmatprep.subr.mxu0 %v278
    %384 = vmatpush1.msra.mxu0 %v277
    %385 = vmatprep.subr.mxu0 %v340
    %386 = vmatpush2.msra.mxu0 %v339
    %387 = vmatprep.subr.mxu0 %v338
    %388 = vmatpush2.msra.mxu0 %v337
    %389 = vmatprep.subr.mxu0 %v336
    %390 = vmatpush2.msra.mxu0 %v335
    %391 = vmatprep.subr.mxu0 %v334
    %392 = vmatpush2.msra.mxu0 %v333
    %393 = vmatprep.subr.mxu0 %v332
    %394 = vmatpush2.msra.mxu0 %v331
    %395 = vmatprep.subr.mxu0 %v330
    %396 = vmatpush2.msra.mxu0 %v329
    %397 = vmatprep.subr.mxu0 %v328
    %398 = vmatpush2.msra.mxu0 %v327
    %399 = vmatprep.subr.mxu0 %v326
    %400 = vmatpush2.msra.mxu0 %v325
    %401 = vmatprep.subr.mxu0 %v324
    %402 = vmatpush2.msra.mxu0 %v323
    %403 = vmatprep.subr.mxu0 %v322
    %404 = vmatpush2.msra.mxu0 %v321
    %405 = vmatprep.subr.mxu0 %v320
    %406 = vmatpush2.msra.mxu0 %v319
    %407 = vmatprep.subr.mxu0 %v318
    %408 = vmatpush2.msra.mxu0 %v317
    %409 = vmatprep.subr.mxu0 %v316
    %410 = vmatpush2.msra.mxu0 %v315
    %411 = vmatprep.subr.mxu0 %v314
    %412 = vmatpush2.msra.mxu0 %v313
    %413 = vmatprep.subr.mxu0 %v312
    %414 = vmatpush2.msra.mxu0 %v311
    %415 = vmatprep.subr.mxu0 %v310
    %416 = vmatpush2.msra.mxu0 %v309
    %417 = vmatprep.mubr.f32.mxu0 %v276
    %418 = vmatmul.mubr.f32.gmra.mxu0 %v275
    %v419 = vpop.f32.mrf.mxu0
    %v420 = vadd.f32 %v346, %v419
    %v421 = vpop.f32.mrf.mxu0
    %v422 = vadd.f32 %v350, %v421
    %423 = vdwg.mxu0
    %s424 = scalar_lea.vmem %s6, 1
    %v425 = vld [vmem:[%s424] ss:$4 sm:$0x3]
    %s426 = scalar_lea.vmem %s6, 2
    %v427 = vld [vmem:[%s426] ss:$4 sm:$0x3]
    %v428 = vadd.f32 %v420, %v422
    %429 = vadd.xlane.f32.xlu0 %v428
    %v430 = vpop.xlane.xlu0 %429
    %v431 = vmul.f32 %v430, %v227
    %v432 = vsub.f32 %v420, %v431
    %v433 = vsub.f32 %v422, %v431
    %v434 = vmul.f32 %v432, %v432
    %v435 = vmul.f32 %v433, %v433
    %v436 = vadd.f32 %v434, %v435
    %437 = vadd.xlane.f32.xlu0 %v436
    %v438 = vpop.xlane.xlu0 %437
    %v439 = vmul.f32 %v438, %v227
    %v440 = vadd.f32 %v439, 1e-05
    %v441 = vrsqrt.pop %v440
    %v442 = vmul.f32 %v432, %v441
    %v443 = vmul.f32 %v433, %v441
    %v445 = vlaneseq
    %v446 = vshrl.u32 %v445, 7
    %v447 = vsub.s32 0, %v446
    %v448 = vrot.slane %v425, %v447
    %v449 = vlaneseq
    %v450 = vshrl.u32 %v449, 7
    %v451 = vsub.s32 1, %v450
    %v452 = vrot.slane %v425, %v451
    %v455 = vmul.f32 %v442, %v448
    %v456 = vmul.f32 %v443, %v452
    %v458 = vlaneseq
    %v459 = vshrl.u32 %v458, 7
    %v460 = vsub.s32 0, %v459
    %v461 = vrot.slane %v427, %v460
    %v462 = vlaneseq
    %v463 = vshrl.u32 %v462, 7
    %v464 = vsub.s32 1, %v463
    %v465 = vrot.slane %v427, %v464
    %v468 = vadd.f32 %v455, %v461
    %v469 = vadd.f32 %v456, %v465
    %v470 = vmul.f32 %v468, 0.5
    %v471 = vmul.f32 %v469, 0.5
    %v472 = vmul.f32 %v468, 0.70710677
    %v473 = vmul.f32 %v469, 0.70710677
    %v474 = verf.f32.pop %v472
    %v475 = verf.f32.pop %v473
    %v476 = vadd.f32 %v474, 1.0
    %v477 = vadd.f32 %v475, 1.0
    %v478 = vmul.f32 %v470, %v476
    %v479 = vmul.f32 %v471, %v477
    %v480 = vld [vmem:[%s7] sm:$0x3]
    %v482 = vlaneseq
    %v483 = vshrl.u32 %v482, 7
    %v484 = vsub.s32 0, %v483
    %v485 = vrot.slane %v480, %v484
    %v486 = vlaneseq
    %v487 = vshrl.u32 %v486, 7
    %v488 = vsub.s32 1, %v487
    %v489 = vrot.slane %v480, %v488
    %v492 = vmul.f32 %v478, %v485
    %v493 = vmul.f32 %v479, %v489
    %v494 = vadd.f32 %v492, %v493
    %495 = vadd.xlane.f32.xlu0 %v494
    %v496 = vpop.xlane.xlu0 %495
    %v497 = vld [vmem:[#allocation2] sm:$0x1]
    %v499 = vlaneseq
    %v500 = vshrl.u32 %v499, 7
    %v501 = vsub.s32 0, %v500
    %v502 = vrot.slane %v497, %v501
    %v504 = vadd.f32 %v496, %v502
    %vm505 = vcmask 7168
    %506 = vst.msk [vmem:[%s9] sm:$0xff] %vm505, %v504
    // Predicated region
    $region42: #{continuous_mlp_reward.1} parent=1 // pred_check
      _
    $region43: #{continuous_mlp_reward.1} parent=1 // pred_check_branch
      %508 = sbr.rel (0) target = $region45
    $region44: #{continuous_mlp_reward.1} parent=1 // pred_region
      _
    $region45: #{continuous_mlp_reward.1} parent=1 // pred_fallthru
      _
    // Predicated region
    $region46: #{continuous_mlp_reward.1} parent=1 // pred_check
      _
    $region47: #{continuous_mlp_reward.1} parent=1 // pred_check_branch
      %510 = sbr.rel (0) target = $region49
    $region48: #{continuous_mlp_reward.1} parent=1 // pred_region
      _
    $region49: #{continuous_mlp_reward.1} parent=1 // pred_fallthru
      _
    %511 = vsyncpa [#allocation4], 1

</llo_original>
